<compile_context>
chip_gen: v7x
topology: tpu7x:2x2x1
jax: 0.10.0
libtpu: 0.0.40
codegen_flags: <defaults>
</compile_context>

<pallas_src>
import jax
import jax.numpy as jnp
from jax.experimental import pallas as pl
from jax.experimental.pallas import tpu as pltpu


def _cdiv(a, b):
    return -(-a // b)


def _sqcc_kernel(x_ref, y_ref, z_ref, o_ref):
    x = x_ref[...].astype(jnp.float32)
    y = y_ref[...].astype(jnp.float32)
    z = z_ref[...].astype(jnp.float32)

    inv_n = jnp.float32(1.0 / x.shape[-1])

    # Per-row means (3 cross-lane reductions -> XLU).
    xm = jnp.sum(x, axis=-1, keepdims=True) * inv_n
    ym = jnp.sum(y, axis=-1, keepdims=True) * inv_n
    zm = jnp.sum(z, axis=-1, keepdims=True) * inv_n

    dx = x - xm
    dy = y - ym
    dz = z - zm

    # Centered second moments, normalized by 1/N (ratio-invariant; keeps all
    # products bounded by ~O(var^2) for float32 safety at large N).
    sxx = jnp.sum(dx * dx, axis=-1, keepdims=True) * inv_n
    syy = jnp.sum(dy * dy, axis=-1, keepdims=True) * inv_n
    szz = jnp.sum(dz * dz, axis=-1, keepdims=True) * inv_n
    sxy = jnp.sum(dx * dy, axis=-1, keepdims=True) * inv_n
    sxz = jnp.sum(dx * dz, axis=-1, keepdims=True) * inv_n
    syz = jnp.sum(dy * dz, axis=-1, keepdims=True) * inv_n

    # Squared partial correlation of X, Y given Z.  Rows with constant Z (or
    # constant X/Y) give 0/0 = NaN, matching the PyTorch reference.
    num = sxy * szz - sxz * syz
    den = (sxx * szz - sxz * sxz) * (syy * szz - syz * syz)
    o_ref[...] = ((num * num) / den).astype(o_ref.dtype)


def _tpu_info():
    """Returns (per-core VMEM bytes, TensorCores per device), with fallbacks."""
    kind = ""
    try:
        kind = (jax.devices()[0].device_kind or "").lower()
    except Exception:
        pass
    is_v7 = ("v7" in kind) or ("7x" in kind)
    vmem = None
    try:
        vmem = int(pltpu.get_tpu_info().vmem_capacity_bytes)
    except Exception:
        vmem = None
    if not vmem or vmem <= 0:
        vmem = (64 << 20) if is_v7 else (128 << 20)
    num_cores = 2 if is_v7 else 1
    return vmem, num_cores


def _choose_tb(B, mult, per_row_resident, row_in_bytes, vmem_budget, num_cores,
               target_input_bytes_per_step=12 << 20):
    """Pick the batch-tile size (sublane-aligned, VMEM-budgeted)."""
    if B <= mult:
        return B  # single full-extent block; no alignment requirement
    # Residency cap: double-buffered inputs + compute temporaries must fit.
    cap = max(mult, (vmem_budget // per_row_resident) // mult * mult)
    # ~4 MiB per input per grid step (12 MiB total) amortizes the ~0.35 us
    # per-step pipeline overhead to <10% on v7x; harmless on v5e/v6e.
    tb = max(mult, min(cap, (target_input_bytes_per_step // row_in_bytes)
                       // mult * mult))
    if tb >= B:
        return B
    if num_cores > 1 and B >= 2 * num_cores * mult:
        # v7x: >= 2 grid steps per TensorCore and a step count that is a
        # multiple of the core count, so CORE_PARALLEL balances the split.
        n_tiles = max(_cdiv(B, tb), 2 * num_cores)
        n_tiles = _cdiv(n_tiles, num_cores) * num_cores
        tb = max(mult, min(tb, _cdiv(_cdiv(B, n_tiles), mult) * mult))
    return tb


def squared_conditional_correlation(X, Y, Z, *, tb=None):
    """X, Y, Z: (B, N) -> (B,) float32 squared partial correlation."""
    B, N = X.shape
    assert Y.shape == (B, N) and Z.shape == (B, N)

    itemsizes = tuple(int(jnp.dtype(a.dtype).itemsize) for a in (X, Y, Z))
    # Sublane alignment for the narrowest input dtype: f32 -> 8, bf16 -> 16,
    # 8-bit -> 32 (sub-32-bit dtypes pack along sublanes).
    mult = 8 * max(1, 4 // min(itemsizes))
    # Per batch-row VMEM residency: 3 inputs x 2 pipeline buffers, plus ~7
    # f32-block-sized compute temporaries (f32 up-casts + dx/dy/dz + one
    # product), plus the double-buffered (tb, 1) output.
    row_in_bytes = N * sum(itemsizes)
    per_row_resident = 2 * row_in_bytes + 7 * 4 * N + 2 * 4

    vmem_bytes, num_cores = _tpu_info()
    vmem_budget = max(32 << 20,
                      min(vmem_bytes - (16 << 20), (vmem_bytes * 3) // 4))

    if tb is None:
        tb = _choose_tb(B, mult, per_row_resident, row_in_bytes,
                        vmem_budget, num_cores)
    else:
        tb = int(tb)
        if tb < B:
            tb = max(mult, _cdiv(tb, mult) * mult)
        tb = min(tb, B)

    resident_bytes = tb * per_row_resident
    if resident_bytes > vmem_budget:
        # TODO(synk): add an N-tiled accumulator variant (second grid axis over
        # N marked "arbitrary", pl.when init/finalize on scratch stats) for
        # rows too long to keep a full (tb, N) block resident in VMEM.
        raise ValueError(
            f"(tb={tb}, N={N}) needs ~{resident_bytes >> 20} MiB of VMEM, over "
            f"the {vmem_budget >> 20} MiB budget; N-tiling not implemented.")

    n_tiles = _cdiv(B, tb)  # ragged last block is masked by Pallas; no padding
    in_spec = pl.BlockSpec((tb, N), lambda i: (i, 0))
    out_spec = pl.BlockSpec((tb, 1), lambda i: (i, 0))

    # On 2-TC chips ask for an explicit cross-core split of the batch axis;
    # plain "parallel" is the always-valid fallback.
    semantics_options = []
    if num_cores > 1 and n_tiles > 1:
        semantics_options.append((pltpu.CORE_PARALLEL,))
    semantics_options.append(("parallel",))

    last_err = None
    for dim_sem in semantics_options:
        try:
            out = pl.pallas_call(
                _sqcc_kernel,
                out_shape=jax.ShapeDtypeStruct((B, 1), jnp.float32),
                grid_spec=pltpu.PrefetchScalarGridSpec(
                    num_scalar_prefetch=0,
                    grid=(n_tiles,),
                    in_specs=[in_spec, in_spec, in_spec],
                    out_specs=out_spec,
                ),
                compiler_params=pltpu.CompilerParams(
                    dimension_semantics=dim_sem,
                    vmem_limit_bytes=int(vmem_budget),
                ),
            )(X, Y, Z)
            out = jax.block_until_ready(out)
            return out[:, 0]
        except Exception as e:  # e.g. CORE_PARALLEL rejected -> retry fallback
            last_err = e
    raise last_err


def _reference(X, Y, Z):
    # Pure-JAX reference mirroring the PyTorch module exactly (including the
    # mathematically-redundant re-centering of the residuals).
    zm = jnp.mean(Z, axis=-1, keepdims=True)
    xm = jnp.mean(X, axis=-1, keepdims=True)
    ym = jnp.mean(Y, axis=-1, keepdims=True)
    dz = Z - zm
    var_z = jnp.sum(dz * dz, axis=-1, keepdims=True)
    a_x = jnp.sum(dz * (X - xm), axis=-1, keepdims=True) / var_z
    b_x = xm - a_x * zm
    a_y = jnp.sum(dz * (Y - ym), axis=-1, keepdims=True) / var_z
    b_y = ym - a_y * zm
    res_x = X - (Z * a_x + b_x)
    res_y = Y - (Z * a_y + b_y)
    dX = res_x - jnp.mean(res_x, axis=-1, keepdims=True)
    dY = res_y - jnp.mean(res_y, axis=-1, keepdims=True)
    num = jnp.sum(dX * dY, axis=-1) ** 2
    den = jnp.sum(dX * dX, axis=-1) * jnp.sum(dY * dY, axis=-1)
    return num / den


if __name__ == "__main__":
    key = jax.random.PRNGKey(0)
    kx, ky, kz = jax.random.split(key, 3)

    B, N = 16, 128
    Z = jax.random.normal(kz, (B, N), dtype=jnp.float32)
    # X, Y partially driven by Z so the regression is nontrivial.
    X = 0.7 * Z + jax.random.normal(kx, (B, N), dtype=jnp.float32)
    Y = -0.3 * Z + jax.random.normal(ky, (B, N), dtype=jnp.float32)

    ref = _reference(X, Y, Z)

    out = squared_conditional_correlation(X, Y, Z)
    out = jax.block_until_ready(out)
    assert out.shape == (B,)
    assert jnp.allclose(out, ref, rtol=1e-4, atol=1e-5), (out, ref)

    # Odd batch size: single full-extent block (no padding anywhere).
    out5 = squared_conditional_correlation(X[:5], Y[:5], Z[:5])
    out5 = jax.block_until_ready(out5)
    assert out5.shape == (5,)
    assert jnp.allclose(out5, ref[:5], rtol=1e-4, atol=1e-5), (out5, ref[:5])

    # Forced small tile: exercises the ragged (masked) last grid block path
    # that replaced the old jnp.pad.
    out13 = squared_conditional_correlation(X[:13], Y[:13], Z[:13], tb=8)
    out13 = jax.block_until_ready(out13)
    assert out13.shape == (13,)
    assert jnp.allclose(out13, ref[:13], rtol=1e-4, atol=1e-5), (out13, ref[:13])

    # Narrow-dtype path: bf16 stays bf16 in HBM, widened in-register.
    Xb, Yb, Zb = (a.astype(jnp.bfloat16) for a in (X, Y, Z))
    refb = _reference(Xb.astype(jnp.float32), Yb.astype(jnp.float32),
                      Zb.astype(jnp.float32))
    outb = squared_conditional_correlation(Xb, Yb, Zb)
    outb = jax.block_until_ready(outb)
    assert outb.shape == (B,)
    assert jnp.allclose(outb, refb, rtol=1e-3, atol=1e-4), (outb, refb)

    print("KERNEL_OK")
</pallas_src>

<mosaic_0001>
module attributes {stable_mosaic.version = 11 : i64} {
  func.func @_sqcc_kernel(%arg0: i32, %arg1: memref<16x128xf32, #tpu.memory_space<vmem>>, %arg2: memref<16x128xf32, #tpu.memory_space<vmem>>, %arg3: memref<16x128xf32, #tpu.memory_space<vmem>>, %arg4: memref<16x1xf32, #tpu.memory_space<vmem>>) attributes {dimension_semantics = [#tpu.dimension_semantics<parallel>], iteration_bounds = array<i64: 1>, scalar_prefetch = 0 : i64, scratch_operands = 0 : i64, tpu.core_type = #tpu.core_type<tc>, window_params = [{transform_indices = @transform_0, window_bounds = array<i64: 16, 128>}, {transform_indices = @transform_1, window_bounds = array<i64: 16, 128>}, {transform_indices = @transform_2, window_bounds = array<i64: 16, 128>}, {transform_indices = @transform_3, window_bounds = array<i64: 16, 1>}]} {
    %c0 = arith.constant 0 : index
    %c0_0 = arith.constant 0 : index
    %0 = vector.load %arg1[%c0, %c0_0] : memref<16x128xf32, #tpu.memory_space<vmem>>, vector<16x128xf32>
    %c0_1 = arith.constant 0 : index
    %c0_2 = arith.constant 0 : index
    %1 = vector.load %arg2[%c0_1, %c0_2] : memref<16x128xf32, #tpu.memory_space<vmem>>, vector<16x128xf32>
    %c0_3 = arith.constant 0 : index
    %c0_4 = arith.constant 0 : index
    %2 = vector.load %arg3[%c0_3, %c0_4] : memref<16x128xf32, #tpu.memory_space<vmem>>, vector<16x128xf32>
    %cst = arith.constant dense<0.000000e+00> : vector<16xf32>
    %3 = vector.multi_reduction <add>, %0, %cst [1] : vector<16x128xf32> to vector<16xf32>
    %4 = vector.shape_cast %3 : vector<16xf32> to vector<16x1xf32>
    %cst_5 = arith.constant 7.812500e-03 : f32
    %5 = vector.broadcast %cst_5 : f32 to vector<16x1xf32>
    %6 = arith.mulf %4, %5 : vector<16x1xf32>
    %cst_6 = arith.constant dense<0.000000e+00> : vector<16xf32>
    %7 = vector.multi_reduction <add>, %1, %cst_6 [1] : vector<16x128xf32> to vector<16xf32>
    %8 = vector.shape_cast %7 : vector<16xf32> to vector<16x1xf32>
    %cst_7 = arith.constant 7.812500e-03 : f32
    %9 = vector.broadcast %cst_7 : f32 to vector<16x1xf32>
    %10 = arith.mulf %8, %9 : vector<16x1xf32>
    %cst_8 = arith.constant dense<0.000000e+00> : vector<16xf32>
    %11 = vector.multi_reduction <add>, %2, %cst_8 [1] : vector<16x128xf32> to vector<16xf32>
    %12 = vector.shape_cast %11 : vector<16xf32> to vector<16x1xf32>
    %cst_9 = arith.constant 7.812500e-03 : f32
    %13 = vector.broadcast %cst_9 : f32 to vector<16x1xf32>
    %14 = arith.mulf %12, %13 : vector<16x1xf32>
    %15 = vector.broadcast %6 : vector<16x1xf32> to vector<16x128xf32>
    %16 = arith.subf %0, %15 : vector<16x128xf32>
    %17 = vector.broadcast %10 : vector<16x1xf32> to vector<16x128xf32>
    %18 = arith.subf %1, %17 : vector<16x128xf32>
    %19 = vector.broadcast %14 : vector<16x1xf32> to vector<16x128xf32>
    %20 = arith.subf %2, %19 : vector<16x128xf32>
    %21 = arith.mulf %16, %16 : vector<16x128xf32>
    %cst_10 = arith.constant dense<0.000000e+00> : vector<16xf32>
    %22 = vector.multi_reduction <add>, %21, %cst_10 [1] : vector<16x128xf32> to vector<16xf32>
    %23 = vector.shape_cast %22 : vector<16xf32> to vector<16x1xf32>
    %cst_11 = arith.constant 7.812500e-03 : f32
    %24 = vector.broadcast %cst_11 : f32 to vector<16x1xf32>
    %25 = arith.mulf %23, %24 : vector<16x1xf32>
    %26 = arith.mulf %18, %18 : vector<16x128xf32>
    %cst_12 = arith.constant dense<0.000000e+00> : vector<16xf32>
    %27 = vector.multi_reduction <add>, %26, %cst_12 [1] : vector<16x128xf32> to vector<16xf32>
    %28 = vector.shape_cast %27 : vector<16xf32> to vector<16x1xf32>
    %cst_13 = arith.constant 7.812500e-03 : f32
    %29 = vector.broadcast %cst_13 : f32 to vector<16x1xf32>
    %30 = arith.mulf %28, %29 : vector<16x1xf32>
    %31 = arith.mulf %20, %20 : vector<16x128xf32>
    %cst_14 = arith.constant dense<0.000000e+00> : vector<16xf32>
    %32 = vector.multi_reduction <add>, %31, %cst_14 [1] : vector<16x128xf32> to vector<16xf32>
    %33 = vector.shape_cast %32 : vector<16xf32> to vector<16x1xf32>
    %cst_15 = arith.constant 7.812500e-03 : f32
    %34 = vector.broadcast %cst_15 : f32 to vector<16x1xf32>
    %35 = arith.mulf %33, %34 : vector<16x1xf32>
    %36 = arith.mulf %16, %18 : vector<16x128xf32>
    %cst_16 = arith.constant dense<0.000000e+00> : vector<16xf32>
    %37 = vector.multi_reduction <add>, %36, %cst_16 [1] : vector<16x128xf32> to vector<16xf32>
    %38 = vector.shape_cast %37 : vector<16xf32> to vector<16x1xf32>
    %cst_17 = arith.constant 7.812500e-03 : f32
    %39 = vector.broadcast %cst_17 : f32 to vector<16x1xf32>
    %40 = arith.mulf %38, %39 : vector<16x1xf32>
    %41 = arith.mulf %16, %20 : vector<16x128xf32>
    %cst_18 = arith.constant dense<0.000000e+00> : vector<16xf32>
    %42 = vector.multi_reduction <add>, %41, %cst_18 [1] : vector<16x128xf32> to vector<16xf32>
    %43 = vector.shape_cast %42 : vector<16xf32> to vector<16x1xf32>
    %cst_19 = arith.constant 7.812500e-03 : f32
    %44 = vector.broadcast %cst_19 : f32 to vector<16x1xf32>
    %45 = arith.mulf %43, %44 : vector<16x1xf32>
    %46 = arith.mulf %18, %20 : vector<16x128xf32>
    %cst_20 = arith.constant dense<0.000000e+00> : vector<16xf32>
    %47 = vector.multi_reduction <add>, %46, %cst_20 [1] : vector<16x128xf32> to vector<16xf32>
    %48 = vector.shape_cast %47 : vector<16xf32> to vector<16x1xf32>
    %cst_21 = arith.constant 7.812500e-03 : f32
    %49 = vector.broadcast %cst_21 : f32 to vector<16x1xf32>
    %50 = arith.mulf %48, %49 : vector<16x1xf32>
    %51 = arith.mulf %40, %35 : vector<16x1xf32>
    %52 = arith.mulf %45, %50 : vector<16x1xf32>
    %53 = arith.subf %51, %52 : vector<16x1xf32>
    %54 = arith.mulf %25, %35 : vector<16x1xf32>
    %55 = arith.mulf %45, %45 : vector<16x1xf32>
    %56 = arith.subf %54, %55 : vector<16x1xf32>
    %57 = arith.mulf %30, %35 : vector<16x1xf32>
    %58 = arith.mulf %50, %50 : vector<16x1xf32>
    %59 = arith.subf %57, %58 : vector<16x1xf32>
    %60 = arith.mulf %56, %59 : vector<16x1xf32>
    %61 = arith.mulf %53, %53 : vector<16x1xf32>
    %62 = arith.divf %61, %60 : vector<16x1xf32>
    %c0_22 = arith.constant 0 : index
    %c0_23 = arith.constant 0 : index
    %63 = vector.load %arg4[%c0_22, %c0_23] : memref<16x1xf32, #tpu.memory_space<vmem>>, vector<16x1xf32>
    tpu.vector_store %arg4[%c0_22, %c0_23], %62 {strides = array<i32>} : memref<16x1xf32, #tpu.memory_space<vmem>>, vector<16x1xf32>,
    return
  }
  func.func @transform_0(%arg0: i32) -> (i32, i32) {
    %c0_i32 = arith.constant 0 : i32
    %c0_i32_0 = arith.constant 0 : i32
    return %arg0, %c0_i32 : i32, i32
  }
  func.func @transform_1(%arg0: i32) -> (i32, i32) {
    %c0_i32 = arith.constant 0 : i32
    %c0_i32_0 = arith.constant 0 : i32
    return %arg0, %c0_i32 : i32, i32
  }
  func.func @transform_2(%arg0: i32) -> (i32, i32) {
    %c0_i32 = arith.constant 0 : i32
    %c0_i32_0 = arith.constant 0 : i32
    return %arg0, %c0_i32 : i32, i32
  }
  func.func @transform_3(%arg0: i32) -> (i32, i32) {
    %c0_i32 = arith.constant 0 : i32
    %c0_i32_0 = arith.constant 0 : i32
    return %arg0, %c0_i32 : i32, i32
  }
}

</mosaic_0001>

<llo_original>
// kernel: tpu_custom_call.1
$region0: #{tpu_custom_call.1}
  #allocation0 [shape = 'u32[]', space=smem, size = 0x4, offset = 0x4, fixed_abs, tag = 'smem constant byte address 0x4 - core index']
  #allocation1 [shape = 'u32[144,128]{1,0:T(1,128)}', space=vmem, size = 0x12000, scoped, tag = 'internal scratch']
  %s0 = inlined_call_operand.hbm [shape: f32[16,128], index: 0, kind: input, shape index: {}]
  %s1 = inlined_call_operand.hbm [shape: f32[16,128], index: 1, kind: input, shape index: {}]
  %s2 = inlined_call_operand.hbm [shape: f32[16,128], index: 2, kind: input, shape index: {}]
  %s3 = inlined_call_operand.hbm [shape: f32[16,1], index: 3, kind: output, shape index: {}]
  %s4 = sld [smem:[#allocation0]]
  $region34: #{tpu_custom_call.1} parent=0
    _
  %s6 = ssub.s32 1, %s4
  %s7 = scalar_select 0, %s6, %s4
  $region1: #{tpu_custom_call.1} parent=0
    #allocation2 [shape = 'u8[8192]{0}', space=vmem, size = 0x2000, scoped, tag = 'input window, operand 0, single buffered']
    #allocation3 [shape = 's32[1]{0}', space=sflag, size = 0x4, scoped, tag = 'scoped memory for tpu_custom_call.1']
    #allocation4 [shape = 's32[1]{0}', space=sflag, size = 0x4, scoped, tag = 'scoped memory for tpu_custom_call.1']
    #allocation5 [shape = 'u8[8192]{0}', space=vmem, size = 0x2000, scoped, tag = 'input window, operand 1, single buffered']
    #allocation6 [shape = 's32[1]{0}', space=sflag, size = 0x4, scoped, tag = 'scoped memory for tpu_custom_call.1']
    #allocation7 [shape = 'u8[8192]{0}', space=vmem, size = 0x2000, scoped, tag = 'input window, operand 2, single buffered']
    #allocation8 [shape = 'u8[8192]{0}', space=vmem, size = 0x2000, scoped, tag = 'output window, operand 0, single buffered']
    %8 = vsyncpa [#allocation3], 0
    %9 = vsyncpa [#allocation6], 0
    %10 = vsyncpa [#allocation4], 0
    // Predicated region
    $region2: #{tpu_custom_call.1} parent=1 // pred_check
      _
    $region3: #{tpu_custom_call.1} parent=1 // pred_check_branch
      %12 = sbr.rel (0) target = $region5
    $region4: #{tpu_custom_call.1} parent=1 // pred_region
      %s14 = ssub.s32 256, 256
      %15 = vsyncadd [#allocation3], %s14
      %s16 = sshll.u32 [#allocation2], 4
      %s17 = int_to_ptr.vmem [resolvable:$true] %s16
      %22 = dma.hbm_to_vmem [thread:$0]  %s0, 256, %s17, [#allocation3], 128, 128, 8
    $region5: #{tpu_custom_call.1} parent=1 // pred_fallthru
      _
    // Predicated region
    $region6: #{tpu_custom_call.1} parent=1 // pred_check
      _
    $region7: #{tpu_custom_call.1} parent=1 // pred_check_branch
      %24 = sbr.rel (0) target = $region9
    $region8: #{tpu_custom_call.1} parent=1 // pred_region
      %s26 = ssub.s32 256, 256
      %27 = vsyncadd [#allocation6], %s26
      %s28 = sshll.u32 [#allocation5], 4
      %s29 = int_to_ptr.vmem [resolvable:$true] %s28
      %34 = dma.hbm_to_vmem [thread:$0]  %s1, 256, %s29, [#allocation6], 128, 128, 8
    $region9: #{tpu_custom_call.1} parent=1 // pred_fallthru
      _
    // Predicated region
    $region10: #{tpu_custom_call.1} parent=1 // pred_check
      _
    $region11: #{tpu_custom_call.1} parent=1 // pred_check_branch
      %36 = sbr.rel (0) target = $region13
    $region12: #{tpu_custom_call.1} parent=1 // pred_region
      %s38 = ssub.s32 256, 256
      %39 = vsyncadd [#allocation6], %s38
      %s40 = sshll.u32 [#allocation7], 4
      %s41 = int_to_ptr.vmem [resolvable:$true] %s40
      %46 = dma.hbm_to_vmem [thread:$0]  %s2, 256, %s41, [#allocation6], 128, 128, 8
    $region13: #{tpu_custom_call.1} parent=1 // pred_fallthru
      _
    // Predicated region
    $region14: #{tpu_custom_call.1} parent=1 // pred_check
      _
    $region15: #{tpu_custom_call.1} parent=1 // pred_check_branch
      %48 = sbr.rel (0) target = $region17
    $region16: #{tpu_custom_call.1} parent=1 // pred_region
      %49 = dma.done [#allocation3], 256
    $region17: #{tpu_custom_call.1} parent=1 // pred_fallthru
      _
    // Predicated region
    $region18: #{tpu_custom_call.1} parent=1 // pred_check
      _
    $region19: #{tpu_custom_call.1} parent=1 // pred_check_branch
      %51 = sbr.rel (0) target = $region21
    $region20: #{tpu_custom_call.1} parent=1 // pred_region
      %52 = dma.done [#allocation6], 256
    $region21: #{tpu_custom_call.1} parent=1 // pred_fallthru
      _
    // Predicated region
    $region22: #{tpu_custom_call.1} parent=1 // pred_check
      _
    $region23: #{tpu_custom_call.1} parent=1 // pred_check_branch
      %54 = sbr.rel (0) target = $region25
    $region24: #{tpu_custom_call.1} parent=1 // pred_region
      %55 = dma.done [#allocation6], 256
    $region25: #{tpu_custom_call.1} parent=1 // pred_fallthru
      _
    %v56 = vld [vmem:[#allocation2] sm:$0xff]
    %v57 = vld [vmem:[#allocation2 + $0x8] sm:$0xff]
    %v58 = vld [vmem:[#allocation5] sm:$0xff]
    %v59 = vld [vmem:[#allocation5 + $0x8] sm:$0xff]
    %v60 = vld [vmem:[#allocation7] sm:$0xff]
    %v61 = vld [vmem:[#allocation7 + $0x8] sm:$0xff]
    %62 = vadd.xlane.f32.xlu0 %v56
    %v63 = vpop.xlane.xlu0 %62
    %64 = vadd.xlane.f32.xlu0 %v57
    %v65 = vpop.xlane.xlu0 %64
    %v66 = vmul.f32 %v63, 0.0078125
    %v67 = vmul.f32 %v65, 0.0078125
    %68 = vadd.xlane.f32.xlu0 %v58
    %v69 = vpop.xlane.xlu0 %68
    %70 = vadd.xlane.f32.xlu0 %v59
    %v71 = vpop.xlane.xlu0 %70
    %v72 = vmul.f32 %v69, 0.0078125
    %v73 = vmul.f32 %v71, 0.0078125
    %74 = vadd.xlane.f32.xlu0 %v60
    %v75 = vpop.xlane.xlu0 %74
    %76 = vadd.xlane.f32.xlu0 %v61
    %v77 = vpop.xlane.xlu0 %76
    %v78 = vmul.f32 %v75, 0.0078125
    %v79 = vmul.f32 %v77, 0.0078125
    %v80 = vsub.f32 %v56, %v66
    %v81 = vsub.f32 %v57, %v67
    %v82 = vsub.f32 %v58, %v72
    %v83 = vsub.f32 %v59, %v73
    %v84 = vsub.f32 %v60, %v78
    %v85 = vsub.f32 %v61, %v79
    %v86 = vmul.f32 %v80, %v80
    %v87 = vmul.f32 %v81, %v81
    %88 = vadd.xlane.f32.xlu0 %v86
    %v89 = vpop.xlane.xlu0 %88
    %90 = vadd.xlane.f32.xlu0 %v87
    %v91 = vpop.xlane.xlu0 %90
    %v92 = vmul.f32 %v89, 0.0078125
    %v93 = vmul.f32 %v91, 0.0078125
    %v94 = vmul.f32 %v82, %v82
    %v95 = vmul.f32 %v83, %v83
    %96 = vadd.xlane.f32.xlu0 %v94
    %v97 = vpop.xlane.xlu0 %96
    %98 = vadd.xlane.f32.xlu0 %v95
    %v99 = vpop.xlane.xlu0 %98
    %v100 = vmul.f32 %v97, 0.0078125
    %v101 = vmul.f32 %v99, 0.0078125
    %v102 = vmul.f32 %v84, %v84
    %v103 = vmul.f32 %v85, %v85
    %104 = vadd.xlane.f32.xlu0 %v102
    %v105 = vpop.xlane.xlu0 %104
    %106 = vadd.xlane.f32.xlu0 %v103
    %v107 = vpop.xlane.xlu0 %106
    %v108 = vmul.f32 %v105, 0.0078125
    %v109 = vmul.f32 %v107, 0.0078125
    %v110 = vmul.f32 %v80, %v82
    %v111 = vmul.f32 %v81, %v83
    %112 = vadd.xlane.f32.xlu0 %v110
    %v113 = vpop.xlane.xlu0 %112
    %114 = vadd.xlane.f32.xlu0 %v111
    %v115 = vpop.xlane.xlu0 %114
    %v116 = vmul.f32 %v113, 0.0078125
    %v117 = vmul.f32 %v115, 0.0078125
    %v118 = vmul.f32 %v80, %v84
    %v119 = vmul.f32 %v81, %v85
    %120 = vadd.xlane.f32.xlu0 %v118
    %v121 = vpop.xlane.xlu0 %120
    %122 = vadd.xlane.f32.xlu0 %v119
    %v123 = vpop.xlane.xlu0 %122
    %v124 = vmul.f32 %v121, 0.0078125
    %v125 = vmul.f32 %v123, 0.0078125
    %v126 = vmul.f32 %v82, %v84
    %v127 = vmul.f32 %v83, %v85
    %128 = vadd.xlane.f32.xlu0 %v126
    %v129 = vpop.xlane.xlu0 %128
    %130 = vadd.xlane.f32.xlu0 %v127
    %v131 = vpop.xlane.xlu0 %130
    %v132 = vmul.f32 %v129, 0.0078125
    %v133 = vmul.f32 %v131, 0.0078125
    %v134 = vmul.f32 %v116, %v108
    %v135 = vmul.f32 %v117, %v109
    %v136 = vmul.f32 %v124, %v132
    %v137 = vmul.f32 %v125, %v133
    %v138 = vsub.f32 %v134, %v136
    %v139 = vsub.f32 %v135, %v137
    %v140 = vmul.f32 %v92, %v108
    %v141 = vmul.f32 %v93, %v109
    %v142 = vmul.f32 %v124, %v124
    %v143 = vmul.f32 %v125, %v125
    %v144 = vsub.f32 %v140, %v142
    %v145 = vsub.f32 %v141, %v143
    %v146 = vmul.f32 %v100, %v108
    %v147 = vmul.f32 %v101, %v109
    %v148 = vmul.f32 %v132, %v132
    %v149 = vmul.f32 %v133, %v133
    %v150 = vsub.f32 %v146, %v148
    %v151 = vsub.f32 %v147, %v149
    %v152 = vmul.f32 %v144, %v150
    %v153 = vmul.f32 %v145, %v151
    %v154 = vmul.f32 %v138, %v138
    %v155 = vmul.f32 %v139, %v139
    %v156 = vrcp.pop %v152
    %v157 = vmul.f32 %v154, %v156
    %v158 = vrcp.pop %v153
    %v159 = vmul.f32 %v155, %v158
    %vm160 = vcmask 7168
    %161 = vst.msk [vmem:[#allocation8] sm:$0xff] %vm160, %v157
    %162 = vst.msk [vmem:[#allocation8 + $0x8] sm:$0xff] %vm160, %v159
    // Predicated region
    $region26: #{tpu_custom_call.1} parent=1 // pred_check
      _
    $region27: #{tpu_custom_call.1} parent=1 // pred_check_branch
      %164 = sbr.rel (0) target = $region29
    $region28: #{tpu_custom_call.1} parent=1 // pred_region
      %s166 = ssub.s32 256, 256
      %167 = vsyncadd [#allocation4], %s166
      %s168 = sshll.u32 [#allocation8], 4
      %s169 = int_to_ptr.vmem [resolvable:$true] %s168
      %174 = dma.vmem_to_hbm [thread:$0]  %s169, 256, %s3, [#allocation4], 128, 128, 8
    $region29: #{tpu_custom_call.1} parent=1 // pred_fallthru
      _
    // Predicated region
    $region30: #{tpu_custom_call.1} parent=1 // pred_check
      _
    $region31: #{tpu_custom_call.1} parent=1 // pred_check_branch
      %176 = sbr.rel (0) target = $region33
    $region32: #{tpu_custom_call.1} parent=1 // pred_region
      %177 = dma.done [#allocation4], 256
    $region33: #{tpu_custom_call.1} parent=1 // pred_fallthru
      _
    %178 = vsyncpa [#allocation3], 1
    %179 = vsyncpa [#allocation6], 1
    %180 = vsyncpa [#allocation4], 1

</llo_original>
